<compile_context>
chip_gen: v7x
topology: tpu7x:2x2x1
jax: 0.10.0
libtpu: 0.0.40
codegen_flags: <defaults>
</compile_context>

<pallas_src>
import functools

import jax
import jax.numpy as jnp
from jax.experimental import pallas as pl
from jax.experimental.pallas import tpu as pltpu


def _round_up(x: int, m: int) -> int:
    return ((x + m - 1) // m) * m


def _head_kernel_eval(cls_ref, w_ref, b_ref, out_ref):
    """y = cls @ W + b   (dropout is identity in eval mode)."""
    x = cls_ref[...]                                           # [block_b, H]
    y = jnp.dot(x, w_ref[...], preferred_element_type=jnp.float32)
    y = y + b_ref[...].astype(jnp.float32)                     # [block_b, O_pad]
    out_ref[...] = y.astype(out_ref.dtype)


def _head_kernel_dropout(cls_ref, mask_ref, w_ref, b_ref, out_ref):
    """y = (cls * dropout_mask) @ W + b.

    mask_ref holds the pre-scaled keep mask (0 or 1/(1-p)) in the activation
    dtype, so dropout is a single VPU multiply fused ahead of the MXU matmul.
    """
    x = cls_ref[...] * mask_ref[...]                           # [block_b, H]
    y = jnp.dot(x, w_ref[...], preferred_element_type=jnp.float32)
    y = y + b_ref[...].astype(jnp.float32)
    out_ref[...] = y.astype(out_ref.dtype)


def _dropout_mask(seed, shape, p, dtype):
    """Pre-scaled dropout mask: keep w.p. (1-p), value 1/(1-p), else 0."""
    key = jax.random.PRNGKey(seed)
    keep = jax.random.bernoulli(key, 1.0 - p, shape)
    scale = jnp.asarray(1.0 / (1.0 - p), dtype)
    return keep.astype(dtype) * scale


@functools.partial(jax.jit, static_argnames=("p", "training"))
def roberta_regression_head(last_hidden_state, w, b, seed=0,
                            *, p=0.2, training=False):
    """Pallas implementation of the regression head.

    last_hidden_state: [B, S, H]   (f32 or bf16)
    w:                 [H, O]      (nn.Linear weight, transposed)
    b:                 [O]
    returns:           [B, O]
    """
    B, S, H = last_hidden_state.shape
    H_w, O = w.shape
    assert H_w == H
    dtype = last_hidden_state.dtype

    # CLS slice in the wrapper: only B*H elements ever reach the kernel.
    cls = last_hidden_state[:, 0, :]                           # [B, H]

    # Lane-dense output / weight: pad O (=3) up to a multiple of 128.
    O_pad = max(128, _round_up(O, 128))
    w_pad = jnp.zeros((H, O_pad), w.dtype).at[:, :O].set(w)
    b_pad = jnp.zeros((1, O_pad), b.dtype).at[:, :O].set(b.reshape(1, O))

    # Single block for small batches; tiled, megacore-parallel grid for large.
    block_b = B if B <= 512 else 512
    Bp = _round_up(B, block_b)
    if Bp != B:
        cls = jnp.pad(cls, ((0, Bp - B), (0, 0)))
    num_blocks = Bp // block_b

    use_dropout = bool(training) and p > 0.0

    if use_dropout:
        mask = _dropout_mask(seed, (Bp, H), p, dtype)          # [Bp, H]
        kernel = _head_kernel_dropout
        in_specs = [
            pl.BlockSpec((block_b, H), lambda i: (i, 0)),      # CLS rows
            pl.BlockSpec((block_b, H), lambda i: (i, 0)),      # dropout mask
            pl.BlockSpec((H, O_pad), lambda i: (0, 0)),        # weight
            pl.BlockSpec((1, O_pad), lambda i: (0, 0)),        # bias
        ]
        args = (cls, mask, w_pad, b_pad)
    else:
        kernel = _head_kernel_eval
        in_specs = [
            pl.BlockSpec((block_b, H), lambda i: (i, 0)),      # CLS rows
            pl.BlockSpec((H, O_pad), lambda i: (0, 0)),        # weight
            pl.BlockSpec((1, O_pad), lambda i: (0, 0)),        # bias
        ]
        args = (cls, w_pad, b_pad)

    out = pl.pallas_call(
        kernel,
        out_shape=jax.ShapeDtypeStruct((Bp, O_pad), dtype),
        grid=(num_blocks,),
        in_specs=in_specs,
        out_specs=pl.BlockSpec((block_b, O_pad), lambda i: (i, 0)),
        compiler_params=pltpu.CompilerParams(
            dimension_semantics=("parallel",)),
    )(*args)

    return out[:B, :O]


if __name__ == "__main__":
    # Small, deterministic synthetic shapes consistent with the forward pass:
    # batch=2, seq=8, hidden=32, num_outputs=3.
    B, S, H, O = 2, 8, 32, 3

    key = jax.random.PRNGKey(0)
    k_hidden, k_w, k_b = jax.random.split(key, 3)

    # Stand-in for roberta(...).last_hidden_state
    last_hidden_state = jax.random.normal(k_hidden, (B, S, H), dtype=jnp.float32)

    # nn.Linear(H, 3) default init: U(-1/sqrt(H), 1/sqrt(H))
    bound = 1.0 / (H ** 0.5)
    w = jax.random.uniform(k_w, (H, O), jnp.float32, minval=-bound, maxval=bound)
    b = jax.random.uniform(k_b, (O,), jnp.float32, minval=-bound, maxval=bound)

    # Eval mode (dropout == identity): deterministic, compare vs reference.
    out = roberta_regression_head(last_hidden_state, w, b, seed=0,
                                  p=0.2, training=False)
    out = jax.block_until_ready(out)
    ref = last_hidden_state[:, 0, :] @ w + b
    assert out.shape == (B, O)
    assert jnp.allclose(out, ref, atol=1e-5, rtol=1e-5), (out, ref)

    # Training mode: dropout mask is deterministic from the seed, so we can
    # reproduce it and check exact semantics.
    seed = 123
    out_tr = roberta_regression_head(last_hidden_state, w, b, seed=seed,
                                     p=0.2, training=True)
    out_tr = jax.block_until_ready(out_tr)
    mask_ref = _dropout_mask(seed, (B, H), 0.2, jnp.float32)
    ref_tr = (last_hidden_state[:, 0, :] * mask_ref) @ w + b
    assert out_tr.shape == (B, O)
    assert bool(jnp.all(jnp.isfinite(out_tr)))
    assert jnp.allclose(out_tr, ref_tr, atol=1e-5, rtol=1e-5), (out_tr, ref_tr)

    print("KERNEL_OK")
</pallas_src>

<mosaic_0001>
module attributes {stable_mosaic.version = 11 : i64} {
  func.func @_head_kernel_eval(%arg0: i32, %arg1: memref<2x32xf32, #tpu.memory_space<vmem>>, %arg2: memref<32x128xf32, #tpu.memory_space<vmem>>, %arg3: memref<1x128xf32, #tpu.memory_space<vmem>>, %arg4: memref<2x128xf32, #tpu.memory_space<vmem>>) attributes {dimension_semantics = [#tpu.dimension_semantics<parallel>], iteration_bounds = array<i64: 1>, scalar_prefetch = 0 : i64, scratch_operands = 0 : i64, tpu.core_type = #tpu.core_type<tc>, window_params = [{transform_indices = @transform_0, window_bounds = array<i64: 2, 32>}, {pipeline_mode = #tpu.pipeline_mode<synchronous>, transform_indices = @transform_1, window_bounds = array<i64: 32, 128>}, {pipeline_mode = #tpu.pipeline_mode<synchronous>, transform_indices = @transform_2, window_bounds = array<i64: 1, 128>}, {transform_indices = @transform_3, window_bounds = array<i64: 2, 128>}]} {
    %c0 = arith.constant 0 : index
    %c0_0 = arith.constant 0 : index
    %0 = vector.load %arg1[%c0, %c0_0] : memref<2x32xf32, #tpu.memory_space<vmem>>, vector<2x32xf32>
    %c0_1 = arith.constant 0 : index
    %c0_2 = arith.constant 0 : index
    %1 = vector.load %arg2[%c0_1, %c0_2] : memref<32x128xf32, #tpu.memory_space<vmem>>, vector<32x128xf32>
    %cst = arith.constant dense<0.000000e+00> : vector<2x128xf32>
    %2 = tpu.matmul %0, %1, %cst {dimension_numbers = #tpu.dot_dimension_numbers<[1], [0], [0], [1], [0, 0, 1, 1], [], []>} : vector<2x32xf32>, vector<32x128xf32>, vector<2x128xf32> -> vector<2x128xf32>
    %c0_3 = arith.constant 0 : index
    %c0_4 = arith.constant 0 : index
    %3 = vector.load %arg3[%c0_3, %c0_4] : memref<1x128xf32, #tpu.memory_space<vmem>>, vector<1x128xf32>
    %4 = vector.broadcast %3 : vector<1x128xf32> to vector<2x128xf32>
    %5 = arith.addf %2, %4 : vector<2x128xf32>
    %c0_5 = arith.constant 0 : index
    %c0_6 = arith.constant 0 : index
    %6 = vector.load %arg4[%c0_5, %c0_6] : memref<2x128xf32, #tpu.memory_space<vmem>>, vector<2x128xf32>
    tpu.vector_store %arg4[%c0_5, %c0_6], %5 {strides = array<i32>} : memref<2x128xf32, #tpu.memory_space<vmem>>, vector<2x128xf32>,
    return
  }
  func.func @transform_0(%arg0: i32) -> (i32, i32) {
    %c0_i32 = arith.constant 0 : i32
    %c0_i32_0 = arith.constant 0 : i32
    return %arg0, %c0_i32 : i32, i32
  }
  func.func @transform_1(%arg0: i32) -> (i32, i32) {
    %c0_i32 = arith.constant 0 : i32
    %c0_i32_0 = arith.constant 0 : i32
    %c0_i32_1 = arith.constant 0 : i32
    return %c0_i32, %c0_i32_0 : i32, i32
  }
  func.func @transform_2(%arg0: i32) -> (i32, i32) {
    %c0_i32 = arith.constant 0 : i32
    %c0_i32_0 = arith.constant 0 : i32
    %c0_i32_1 = arith.constant 0 : i32
    return %c0_i32, %c0_i32_0 : i32, i32
  }
  func.func @transform_3(%arg0: i32) -> (i32, i32) {
    %c0_i32 = arith.constant 0 : i32
    %c0_i32_0 = arith.constant 0 : i32
    return %arg0, %c0_i32 : i32, i32
  }
}

</mosaic_0001>

<llo_original>
// kernel: roberta_regression_head.1
$region0: #{roberta_regression_head.1}
  #allocation0 [shape = 'u32[]', space=smem, size = 0x4, offset = 0x4, fixed_abs, tag = 'smem constant byte address 0x4 - core index']
  #allocation1 [shape = 'u32[144,128]{1,0:T(1,128)}', space=vmem, size = 0x12000, scoped, tag = 'internal scratch']
  %s0 = inlined_call_operand.vmem [shape: f32[2,32], index: 0, kind: input, shape index: {}]
  %s1 = inlined_call_operand.vmem [shape: f32[32,128], index: 1, kind: input, shape index: {}]
  %s2 = inlined_call_operand.vmem [shape: f32[1,128], index: 2, kind: input, shape index: {}]
  %s3 = inlined_call_operand.hbm [shape: f32[2,128], index: 3, kind: output, shape index: {}]
  %s4 = sld [smem:[#allocation0]]
  $region22: #{roberta_regression_head.1} parent=0
    _
  %s6 = ssub.s32 1, %s4
  %s7 = scalar_select 0, %s6, %s4
  $region1: #{roberta_regression_head.1} parent=0
    #allocation2 [shape = 'u8[1024]{0}', space=vmem, size = 0x400, scoped, tag = 'output window, operand 0, single buffered']
    #allocation3 [shape = 's32[1]{0}', space=sflag, size = 0x4, scoped, tag = 'scoped memory for roberta_regression_head.1']
    %8 = vsyncpa [#allocation3], 0
    // Predicated region
    $region2: #{roberta_regression_head.1} parent=1 // pred_check
      _
    $region3: #{roberta_regression_head.1} parent=1 // pred_check_branch
      %10 = sbr.rel (0) target = $region5
    $region4: #{roberta_regression_head.1} parent=1 // pred_region
      _
    $region5: #{roberta_regression_head.1} parent=1 // pred_fallthru
      _
    // Predicated region
    $region6: #{roberta_regression_head.1} parent=1 // pred_check
      _
    $region7: #{roberta_regression_head.1} parent=1 // pred_check_branch
      %12 = sbr.rel (0) target = $region9
    $region8: #{roberta_regression_head.1} parent=1 // pred_region
      _
    $region9: #{roberta_regression_head.1} parent=1 // pred_fallthru
      _
    // Predicated region
    $region10: #{roberta_regression_head.1} parent=1 // pred_check
      _
    $region11: #{roberta_regression_head.1} parent=1 // pred_check_branch
      %14 = sbr.rel (0) target = $region13
    $region12: #{roberta_regression_head.1} parent=1 // pred_region
      _
    $region13: #{roberta_regression_head.1} parent=1 // pred_fallthru
      _
    %v15 = vld [vmem:[%s0] sm:$0x3]
    %v16 = vld [vmem:[%s1] sm:$0xff]
    %v17 = vld [vmem:[%s1 + $0x8] sm:$0xff]
    %v18 = vld [vmem:[%s1 + $0x10] sm:$0xff]
    %v19 = vld [vmem:[%s1 + $0x18] sm:$0xff]
    %v20 = vld [vmem:[%s2] sm:$0x1]
    %v22 = vlaneseq
    %v23 = vshrl.u32 %v22, 7
    %v24 = vsub.s32 0, %v23
    %v25 = vrot.slane %v20, %v24
    %vm27 = vcmask 261120
    %v29 = vsel %vm27, %v15, 0
    %31 = vmatprep.subr.mxu0 0.0
    %32 = vmatpush1.msra.mxu0 %v16
    %33 = vmatprep.subr.mxu0 0.0
    %34 = vmatpush1.msra.mxu0 %v17
    %35 = vmatprep.subr.mxu0 0.0
    %36 = vmatpush1.msra.mxu0 %v18
    %37 = vmatprep.subr.mxu0 0.0
    %38 = vmatpush1.msra.mxu0 %v19
    %39 = vmatprep.subr.mxu0 0.0
    %40 = vmatpush1.msra.mxu0 0.0
    %41 = vmatprep.subr.mxu0 0.0
    %42 = vmatpush1.msra.mxu0 0.0
    %43 = vmatprep.subr.mxu0 0.0
    %44 = vmatpush1.msra.mxu0 0.0
    %45 = vmatprep.subr.mxu0 0.0
    %46 = vmatpush1.msra.mxu0 0.0
    %47 = vmatprep.subr.mxu0 0.0
    %48 = vmatpush1.msra.mxu0 0.0
    %49 = vmatprep.subr.mxu0 0.0
    %50 = vmatpush1.msra.mxu0 0.0
    %51 = vmatprep.subr.mxu0 0.0
    %52 = vmatpush1.msra.mxu0 0.0
    %53 = vmatprep.subr.mxu0 0.0
    %54 = vmatpush1.msra.mxu0 0.0
    %55 = vmatprep.subr.mxu0 0.0
    %56 = vmatpush1.msra.mxu0 0.0
    %57 = vmatprep.subr.mxu0 0.0
    %58 = vmatpush1.msra.mxu0 0.0
    %59 = vmatprep.subr.mxu0 0.0
    %60 = vmatpush1.msra.mxu0 0.0
    %61 = vmatprep.subr.mxu0 0.0
    %62 = vmatpush1.msra.mxu0 0.0
    %63 = vmatprep.subr.mxu0 0.0
    %64 = vmatpush1.msra.mxu0 0.0
    %65 = vmatprep.subr.mxu0 0.0
    %66 = vmatpush1.msra.mxu0 0.0
    %67 = vmatprep.subr.mxu0 0.0
    %68 = vmatpush1.msra.mxu0 0.0
    %69 = vmatprep.subr.mxu0 0.0
    %70 = vmatpush1.msra.mxu0 0.0
    %71 = vmatprep.subr.mxu0 0.0
    %72 = vmatpush1.msra.mxu0 0.0
    %73 = vmatprep.subr.mxu0 0.0
    %74 = vmatpush1.msra.mxu0 0.0
    %75 = vmatprep.subr.mxu0 0.0
    %76 = vmatpush1.msra.mxu0 0.0
    %77 = vmatprep.subr.mxu0 0.0
    %78 = vmatpush1.msra.mxu0 0.0
    %79 = vmatprep.subr.mxu0 0.0
    %80 = vmatpush1.msra.mxu0 0.0
    %81 = vmatprep.subr.mxu0 0.0
    %82 = vmatpush1.msra.mxu0 0.0
    %83 = vmatprep.subr.mxu0 0.0
    %84 = vmatpush1.msra.mxu0 0.0
    %85 = vmatprep.subr.mxu0 0.0
    %86 = vmatpush1.msra.mxu0 0.0
    %87 = vmatprep.subr.mxu0 0.0
    %88 = vmatpush1.msra.mxu0 0.0
    %89 = vmatprep.subr.mxu0 0.0
    %90 = vmatpush1.msra.mxu0 0.0
    %91 = vmatprep.subr.mxu0 0.0
    %92 = vmatpush1.msra.mxu0 0.0
    %93 = vmatprep.subr.mxu0 0.0
    %94 = vmatpush1.msra.mxu0 0.0
    %95 = vmatprep.mubr.f32.mxu0 0.0
    %96 = vmatmul.mubr.f32.gmra.mrb[0].mxu0 %v29
    %v97 = vpop.f32.mrb[0].mxu0
    %v98 = vadd.f32 %v25, %v97
    %v99 = vpop.f32.mrb[0].mxu0
    %100 = vdwg.mxu0
    %101 = vst [vmem:[#allocation2] sm:$0x3] %v98
    // Predicated region
    $region14: #{roberta_regression_head.1} parent=1 // pred_check
      _
    $region15: #{roberta_regression_head.1} parent=1 // pred_check_branch
      %103 = sbr.rel (0) target = $region17
    $region16: #{roberta_regression_head.1} parent=1 // pred_region
      %s105 = ssub.s32 32, 32
      %106 = vsyncadd [#allocation3], %s105
      %s108 = sshll.u32 [#allocation2], 4
      %s109 = int_to_ptr.vmem [resolvable:$true] %s108
      %111 = dma.vmem_to_hbm [thread:$0]  %s109, 32, %s3, [#allocation3]
    $region17: #{roberta_regression_head.1} parent=1 // pred_fallthru
      _
    // Predicated region
    $region18: #{roberta_regression_head.1} parent=1 // pred_check
      _
    $region19: #{roberta_regression_head.1} parent=1 // pred_check_branch
      %113 = sbr.rel (0) target = $region21
    $region20: #{roberta_regression_head.1} parent=1 // pred_region
      %114 = dma.done [#allocation3], 32
    $region21: #{roberta_regression_head.1} parent=1 // pred_fallthru
      _
    %115 = vsyncpa [#allocation3], 1

</llo_original>
